<compile_context>
chip_gen: v7x
topology: tpu7x:2x2x1
jax: 0.10.0
libtpu: 0.0.40
codegen_flags: <defaults>
</compile_context>

<pallas_src>
import math

import jax
import jax.numpy as jnp
from jax.experimental import pallas as pl
from jax.experimental.pallas import tpu as pltpu

TOTAL_TIME_STEPS = 1000
TIME_EMB_DIMS = 128
TIME_EMB_DIMS_EXP = 512
_HALF_DIM = TIME_EMB_DIMS // 2

_LARGE_BATCH_TILE = 512  # rows per grid step for large batches


def _round_up(x, m):
    return ((x + m - 1) // m) * m


def _pick_batch_tile(B):
    # B <= 512: single grid step (no per-step overhead), rounded to 8-row sublanes.
    # B  > 512: 512-row tiles -> >= 2 parallel grid steps (v7x megacore) and the
    # ~0.35 us/step overhead is amortized over 1 MB of output per step.
    if B <= _LARGE_BATCH_TILE:
        return _round_up(B, 8)
    return _LARGE_BATCH_TILE


def _time_mlp_kernel(t_ref,              # (tb, 1)   f32  per-tile timesteps
                     freqs_ref,          # (1, 128)  f32  64 freqs duplicated
                     w1_ref, b1_ref,     # (128,512) bf16, (1,512) f32
                     w2_ref, b2_ref,     # (512,512) bf16, (1,512) f32
                     o_ref):             # (tb, 512) f32
    # Vectorized in-kernel sinusoidal embedding (no table, no gather):
    #   x[:, :64] = sin(t * freqs), x[:, 64:] = cos(t * freqs)
    t = t_ref[...]                                                  # (tb, 1) f32
    ang = t * freqs_ref[...]                                        # (tb, 128) f32
    lane = jax.lax.broadcasted_iota(jnp.int32, ang.shape, 1)
    x = jnp.where(lane < _HALF_DIM, jnp.sin(ang), jnp.cos(ang))     # (tb, 128) f32

    h = jnp.dot(x.astype(jnp.bfloat16), w1_ref[...],
                preferred_element_type=jnp.float32)                 # f32 accum
    h = h + b1_ref[...]
    h = h * jax.nn.sigmoid(h)                                       # SiLU in f32 (EUP)
    y = jnp.dot(h.astype(jnp.bfloat16), w2_ref[...],
                preferred_element_type=jnp.float32)
    o_ref[...] = y + b2_ref[...]


def _time_mlp_pallas(time_p, freqs2, w1, b1, w2, b2, tb):
    """time_p: (Bp, 1) f32 with Bp a multiple of tb -> (Bp, 512) float32."""
    Bp = time_p.shape[0]
    D, Dexp = TIME_EMB_DIMS, TIME_EMB_DIMS_EXP
    grid = (Bp // tb,)

    flops = 2 * Bp * (D * Dexp + Dexp * Dexp)
    transcendentals = Bp * (D + Dexp)                 # sin/cos + sigmoid
    bytes_accessed = (w1.size * 2 + w2.size * 2
                      + (b1.size + b2.size + freqs2.size) * 4
                      + Bp * 4 + Bp * Dexp * 4)

    return pl.pallas_call(
        _time_mlp_kernel,
        out_shape=jax.ShapeDtypeStruct((Bp, Dexp), jnp.float32),
        grid_spec=pltpu.PrefetchScalarGridSpec(
            num_scalar_prefetch=0,
            grid=grid,
            in_specs=[
                pl.BlockSpec((tb, 1), lambda i: (i, 0)),        # time (per-tile)
                pl.BlockSpec((1, D), lambda i: (0, 0)),         # freqs (resident)
                pl.BlockSpec((D, Dexp), lambda i: (0, 0)),      # W1   (resident)
                pl.BlockSpec((1, Dexp), lambda i: (0, 0)),      # b1
                pl.BlockSpec((Dexp, Dexp), lambda i: (0, 0)),   # W2   (resident)
                pl.BlockSpec((1, Dexp), lambda i: (0, 0)),      # b2
            ],
            out_specs=pl.BlockSpec((tb, Dexp), lambda i: (i, 0)),
        ),
        compiler_params=pltpu.CompilerParams(
            dimension_semantics=("parallel",),
        ),
        cost_estimate=pl.CostEstimate(
            flops=flops,
            transcendentals=transcendentals,
            bytes_accessed=bytes_accessed,
        ),
    )(time_p, freqs2, w1, b1, w2, b2)


def _make_freqs():
    emb_scale = math.log(10000.0) / (_HALF_DIM - 1)
    return jnp.exp(jnp.arange(_HALF_DIM, dtype=jnp.float32) * -emb_scale)   # (64,)


def make_params(key):
    """Deterministic f32 parameters mirroring the PyTorch __init__."""
    freqs = _make_freqs()                                                    # (64,)
    ts = jnp.arange(TOTAL_TIME_STEPS, dtype=jnp.float32)                     # (1000,)
    ang = ts[:, None] * freqs[None, :]                                       # (1000, 64)
    table = jnp.concatenate([jnp.sin(ang), jnp.cos(ang)], axis=-1)           # (1000, 128)

    k1, k2, k3, k4 = jax.random.split(key, 4)
    lim1 = 1.0 / math.sqrt(TIME_EMB_DIMS)
    w1 = jax.random.uniform(k1, (TIME_EMB_DIMS, TIME_EMB_DIMS_EXP),
                            jnp.float32, -lim1, lim1)
    b1 = jax.random.uniform(k2, (TIME_EMB_DIMS_EXP,), jnp.float32, -lim1, lim1)
    lim2 = 1.0 / math.sqrt(TIME_EMB_DIMS_EXP)
    w2 = jax.random.uniform(k3, (TIME_EMB_DIMS_EXP, TIME_EMB_DIMS_EXP),
                            jnp.float32, -lim2, lim2)
    b2 = jax.random.uniform(k4, (TIME_EMB_DIMS_EXP,), jnp.float32, -lim2, lim2)
    return table, w1, b1, w2, b2


def to_kernel_params(params):
    """One-time cast/reshape of the f32 master params into kernel layout."""
    _, w1, b1, w2, b2 = params
    freqs = _make_freqs()
    freqs2 = jnp.concatenate([freqs, freqs]).reshape(1, TIME_EMB_DIMS)       # (1, 128) f32
    return (freqs2,
            w1.astype(jnp.bfloat16),
            b1.reshape(1, -1).astype(jnp.float32),
            w2.astype(jnp.bfloat16),
            b2.reshape(1, -1).astype(jnp.float32))


def sinusoidal_position_embeddings(time, kernel_params):
    """Forward pass. time: (B,) int -> (B, 512) float32."""
    freqs2, w1, b1, w2, b2 = kernel_params
    B = time.shape[0]
    tb = _pick_batch_tile(B)
    Bp = _round_up(B, tb)
    t = time.astype(jnp.float32)
    if Bp != B:
        t = jnp.pad(t, (0, Bp - B))        # padded rows computed then sliced away
    t = t.reshape(Bp, 1)
    out = _time_mlp_pallas(t, freqs2, w1, b1, w2, b2, tb)
    return out[:B]


def _reference_mixed(time, kernel_params):
    """Plain-JAX emulation of the kernel math (f32 sin/cos, bf16 weights, f32 accum)."""
    freqs2, w1, b1, w2, b2 = kernel_params
    t = time.astype(jnp.float32)[:, None]
    ang = t * freqs2
    x = jnp.concatenate([jnp.sin(ang[:, :_HALF_DIM]), jnp.cos(ang[:, _HALF_DIM:])], axis=-1)
    h = jnp.dot(x.astype(jnp.bfloat16), w1, preferred_element_type=jnp.float32) + b1
    h = h * jax.nn.sigmoid(h)
    return jnp.dot(h.astype(jnp.bfloat16), w2, preferred_element_type=jnp.float32) + b2


def _reference_f32(time, params):
    """Full-f32 reference matching the original PyTorch module."""
    table, w1, b1, w2, b2 = params
    x = jnp.take(table, time.astype(jnp.int32), axis=0)
    h = x @ w1 + b1
    h = h * jax.nn.sigmoid(h)
    return h @ w2 + b2


if __name__ == "__main__":
    key = jax.random.PRNGKey(0)
    pkey, tkey = jax.random.split(key)
    params = make_params(pkey)              # f32 master params (PyTorch init)
    kparams = to_kernel_params(params)      # freqs + bf16 weights + (1,512) f32 biases

    # Small example: batch of 2 timesteps in [0, 1000).
    time = jax.random.randint(tkey, (2,), 0, TOTAL_TIME_STEPS, dtype=jnp.int32)

    out = sinusoidal_position_embeddings(time, kparams)
    out = jax.block_until_ready(out)
    assert out.shape == (2, TIME_EMB_DIMS_EXP), out.shape

    # 1) Kernel correctness vs. an exact emulation of the same mixed-precision math.
    ref_mixed = _reference_mixed(time, kparams)
    err_mixed = float(jnp.abs(out - ref_mixed).max())
    assert err_mixed < 5e-3, err_mixed

    # 2) Semantic closeness to the original f32 PyTorch module
    #    (bf16 weight rounding -> looser tolerance).
    ref_f32 = _reference_f32(time, params)
    err_f32 = float(jnp.abs(out - ref_f32).max())
    assert err_f32 < 5e-2, err_f32

    print("KERNEL_OK")
</pallas_src>

<mosaic_0001>
module attributes {stable_mosaic.version = 11 : i64} {
  func.func @_time_mlp_kernel(%arg0: i32, %arg1: memref<8x1xf32, #tpu.memory_space<vmem>>, %arg2: memref<1x128xf32, #tpu.memory_space<vmem>>, %arg3: memref<128x512xbf16, #tpu.memory_space<vmem>>, %arg4: memref<1x512xf32, #tpu.memory_space<vmem>>, %arg5: memref<512x512xbf16, #tpu.memory_space<vmem>>, %arg6: memref<1x512xf32, #tpu.memory_space<vmem>>, %arg7: memref<8x512xf32, #tpu.memory_space<vmem>>) attributes {dimension_semantics = [#tpu.dimension_semantics<parallel>], iteration_bounds = array<i64: 1>, scalar_prefetch = 0 : i64, scratch_operands = 0 : i64, tpu.core_type = #tpu.core_type<tc>, window_params = [{transform_indices = @transform_0, window_bounds = array<i64: 8, 1>}, {pipeline_mode = #tpu.pipeline_mode<synchronous>, transform_indices = @transform_1, window_bounds = array<i64: 1, 128>}, {pipeline_mode = #tpu.pipeline_mode<synchronous>, transform_indices = @transform_2, window_bounds = array<i64: 128, 512>}, {pipeline_mode = #tpu.pipeline_mode<synchronous>, transform_indices = @transform_3, window_bounds = array<i64: 1, 512>}, {pipeline_mode = #tpu.pipeline_mode<synchronous>, transform_indices = @transform_4, window_bounds = array<i64: 512, 512>}, {pipeline_mode = #tpu.pipeline_mode<synchronous>, transform_indices = @transform_5, window_bounds = array<i64: 1, 512>}, {transform_indices = @transform_6, window_bounds = array<i64: 8, 512>}]} {
    %c0 = arith.constant 0 : index
    %c0_0 = arith.constant 0 : index
    %0 = vector.load %arg1[%c0, %c0_0] : memref<8x1xf32, #tpu.memory_space<vmem>>, vector<8x1xf32>
    %c0_1 = arith.constant 0 : index
    %c0_2 = arith.constant 0 : index
    %1 = vector.load %arg2[%c0_1, %c0_2] : memref<1x128xf32, #tpu.memory_space<vmem>>, vector<1x128xf32>
    %2 = vector.broadcast %0 : vector<8x1xf32> to vector<8x128xf32>
    %3 = vector.broadcast %1 : vector<1x128xf32> to vector<8x128xf32>
    %4 = arith.mulf %2, %3 : vector<8x128xf32>
    %5 = tpu.iota {dimensions = array<i32: 1>} : vector<8x128xi32>
    %c64_i32 = arith.constant 64 : i32
    %6 = vector.broadcast %c64_i32 : i32 to vector<8x128xi32>
    %7 = arith.cmpi slt, %5, %6 : vector<8x128xi32>
    %8 = math.sin %4 : vector<8x128xf32>
    %9 = math.cos %4 : vector<8x128xf32>
    %10 = arith.select %7, %8, %9 : vector<8x128xi1>, vector<8x128xf32>
    %11 = arith.truncf %10 : vector<8x128xf32> to vector<8x128xbf16>
    %c0_3 = arith.constant 0 : index
    %c0_4 = arith.constant 0 : index
    %12 = vector.load %arg3[%c0_3, %c0_4] : memref<128x512xbf16, #tpu.memory_space<vmem>>, vector<128x512xbf16>
    %cst = arith.constant dense<0.000000e+00> : vector<8x512xf32>
    %13 = tpu.matmul %11, %12, %cst {dimension_numbers = #tpu.dot_dimension_numbers<[1], [0], [0], [1], [0, 0, 1, 1], [], []>} : vector<8x128xbf16>, vector<128x512xbf16>, vector<8x512xf32> -> vector<8x512xf32>
    %c0_5 = arith.constant 0 : index
    %c0_6 = arith.constant 0 : index
    %14 = vector.load %arg4[%c0_5, %c0_6] : memref<1x512xf32, #tpu.memory_space<vmem>>, vector<1x512xf32>
    %15 = vector.broadcast %14 : vector<1x512xf32> to vector<8x512xf32>
    %16 = arith.addf %13, %15 : vector<8x512xf32>
    %17 = arith.negf %16 : vector<8x512xf32>
    %18 = math.exp %17 : vector<8x512xf32>
    %cst_7 = arith.constant 1.000000e+00 : f32
    %19 = vector.broadcast %cst_7 : f32 to vector<8x512xf32>
    %20 = arith.addf %19, %18 : vector<8x512xf32>
    %21 = arith.divf %19, %20 : vector<8x512xf32>
    %22 = arith.mulf %16, %21 : vector<8x512xf32>
    %23 = arith.truncf %22 : vector<8x512xf32> to vector<8x512xbf16>
    %c0_8 = arith.constant 0 : index
    %c0_9 = arith.constant 0 : index
    %24 = vector.load %arg5[%c0_8, %c0_9] : memref<512x512xbf16, #tpu.memory_space<vmem>>, vector<512x512xbf16>
    %cst_10 = arith.constant dense<0.000000e+00> : vector<8x512xf32>
    %25 = tpu.matmul %23, %24, %cst_10 {dimension_numbers = #tpu.dot_dimension_numbers<[1], [0], [0], [1], [0, 0, 1, 1], [], []>} : vector<8x512xbf16>, vector<512x512xbf16>, vector<8x512xf32> -> vector<8x512xf32>
    %c0_11 = arith.constant 0 : index
    %c0_12 = arith.constant 0 : index
    %26 = vector.load %arg6[%c0_11, %c0_12] : memref<1x512xf32, #tpu.memory_space<vmem>>, vector<1x512xf32>
    %27 = vector.broadcast %26 : vector<1x512xf32> to vector<8x512xf32>
    %28 = arith.addf %25, %27 : vector<8x512xf32>
    %c0_13 = arith.constant 0 : index
    %c0_14 = arith.constant 0 : index
    %29 = vector.load %arg7[%c0_13, %c0_14] : memref<8x512xf32, #tpu.memory_space<vmem>>, vector<8x512xf32>
    tpu.vector_store %arg7[%c0_13, %c0_14], %28 {strides = array<i32>} : memref<8x512xf32, #tpu.memory_space<vmem>>, vector<8x512xf32>,
    return
  }
  func.func @transform_0(%arg0: i32) -> (i32, i32) {
    %c0_i32 = arith.constant 0 : i32
    %c0_i32_0 = arith.constant 0 : i32
    return %arg0, %c0_i32 : i32, i32
  }
  func.func @transform_1(%arg0: i32) -> (i32, i32) {
    %c0_i32 = arith.constant 0 : i32
    %c0_i32_0 = arith.constant 0 : i32
    %c0_i32_1 = arith.constant 0 : i32
    return %c0_i32, %c0_i32_0 : i32, i32
  }
  func.func @transform_2(%arg0: i32) -> (i32, i32) {
    %c0_i32 = arith.constant 0 : i32
    %c0_i32_0 = arith.constant 0 : i32
    %c0_i32_1 = arith.constant 0 : i32
    return %c0_i32, %c0_i32_0 : i32, i32
  }
  func.func @transform_3(%arg0: i32) -> (i32, i32) {
    %c0_i32 = arith.constant 0 : i32
    %c0_i32_0 = arith.constant 0 : i32
    %c0_i32_1 = arith.constant 0 : i32
    return %c0_i32, %c0_i32_0 : i32, i32
  }
  func.func @transform_4(%arg0: i32) -> (i32, i32) {
    %c0_i32 = arith.constant 0 : i32
    %c0_i32_0 = arith.constant 0 : i32
    %c0_i32_1 = arith.constant 0 : i32
    return %c0_i32, %c0_i32_0 : i32, i32
  }
  func.func @transform_5(%arg0: i32) -> (i32, i32) {
    %c0_i32 = arith.constant 0 : i32
    %c0_i32_0 = arith.constant 0 : i32
    %c0_i32_1 = arith.constant 0 : i32
    return %c0_i32, %c0_i32_0 : i32, i32
  }
  func.func @transform_6(%arg0: i32) -> (i32, i32) {
    %c0_i32 = arith.constant 0 : i32
    %c0_i32_0 = arith.constant 0 : i32
    return %arg0, %c0_i32 : i32, i32
  }
}

</mosaic_0001>

<llo_original>
// kernel: tpu_custom_call.1
$region0: #{tpu_custom_call.1}
  #allocation0 [shape = 'u32[]', space=smem, size = 0x4, offset = 0x4, fixed_abs, tag = 'smem constant byte address 0x4 - core index']
  #allocation1 [shape = 'u32[144,128]{1,0:T(1,128)}', space=vmem, size = 0x12000, scoped, tag = 'internal scratch']
  %s0 = inlined_call_operand.vmem [shape: f32[8,1], index: 0, kind: input, shape index: {}]
  %s1 = inlined_call_operand.vmem [shape: f32[1,128], index: 1, kind: input, shape index: {}]
  %s2 = inlined_call_operand.hbm [shape: bf16[128,512], index: 2, kind: input, shape index: {}]
  %s3 = inlined_call_operand.vmem [shape: f32[1,512], index: 3, kind: input, shape index: {}]
  %s4 = inlined_call_operand.hbm [shape: bf16[512,512], index: 4, kind: input, shape index: {}]
  %s5 = inlined_call_operand.vmem [shape: f32[1,512], index: 5, kind: input, shape index: {}]
  %s6 = inlined_call_operand.hbm [shape: f32[8,512], index: 6, kind: output, shape index: {}]
  %s7 = sld [smem:[#allocation0]]
  $region42: #{tpu_custom_call.1} parent=0
    _
  %s9 = ssub.s32 1, %s7
  %s10 = scalar_select 0, %s9, %s7
  $region1: #{tpu_custom_call.1} parent=0
    #allocation2 [shape = 'u8[131072]{0}', space=vmem, size = 0x20000, scoped, tag = 'input window, operand 2, single buffered']
    #allocation3 [shape = 's32[1]{0}', space=sflag, size = 0x4, scoped, tag = 'scoped memory for tpu_custom_call.1']
    #allocation4 [shape = 's32[1]{0}', space=sflag, size = 0x4, scoped, tag = 'scoped memory for tpu_custom_call.1']
    #allocation5 [shape = 'u8[524288]{0}', space=vmem, size = 0x80000, scoped, tag = 'input window, operand 4, single buffered']
    #allocation6 [shape = 's32[1]{0}', space=sflag, size = 0x4, scoped, tag = 'scoped memory for tpu_custom_call.1']
    #allocation7 [shape = 'u8[16384]{0}', space=vmem, size = 0x4000, scoped, tag = 'output window, operand 0, single buffered']
    %11 = vsyncpa [#allocation3], 0
    %12 = vsyncpa [#allocation6], 0
    %13 = vsyncpa [#allocation4], 0
    // Predicated region
    $region2: #{tpu_custom_call.1} parent=1 // pred_check
      _
    $region3: #{tpu_custom_call.1} parent=1 // pred_check_branch
      %15 = sbr.rel (0) target = $region5
    $region4: #{tpu_custom_call.1} parent=1 // pred_region
      _
    $region5: #{tpu_custom_call.1} parent=1 // pred_fallthru
      _
    // Predicated region
    $region6: #{tpu_custom_call.1} parent=1 // pred_check
      _
    $region7: #{tpu_custom_call.1} parent=1 // pred_check_branch
      %17 = sbr.rel (0) target = $region9
    $region8: #{tpu_custom_call.1} parent=1 // pred_region
      _
    $region9: #{tpu_custom_call.1} parent=1 // pred_fallthru
      _
    // Predicated region
    $region10: #{tpu_custom_call.1} parent=1 // pred_check
      _
    $region11: #{tpu_custom_call.1} parent=1 // pred_check_branch
      %19 = sbr.rel (0) target = $region13
    $region12: #{tpu_custom_call.1} parent=1 // pred_region
      %s21 = ssub.s32 4096, 4096
      %22 = vsyncadd [#allocation3], %s21
      %s23 = sshll.u32 [#allocation2], 4
      %s24 = int_to_ptr.vmem [resolvable:$true] %s23
      %29 = dma.hbm_to_vmem [thread:$0]  %s2, 4096, %s24, [#allocation3], 256, 256, 16
    $region13: #{tpu_custom_call.1} parent=1 // pred_fallthru
      _
    // Predicated region
    $region14: #{tpu_custom_call.1} parent=1 // pred_check
      _
    $region15: #{tpu_custom_call.1} parent=1 // pred_check_branch
      %31 = sbr.rel (0) target = $region17
    $region16: #{tpu_custom_call.1} parent=1 // pred_region
      _
    $region17: #{tpu_custom_call.1} parent=1 // pred_fallthru
      _
    // Predicated region
    $region18: #{tpu_custom_call.1} parent=1 // pred_check
      _
    $region19: #{tpu_custom_call.1} parent=1 // pred_check_branch
      %33 = sbr.rel (0) target = $region21
    $region20: #{tpu_custom_call.1} parent=1 // pred_region
      %s35 = ssub.s32 16384, 16384
      %36 = vsyncadd [#allocation6], %s35
      %s37 = sshll.u32 [#allocation5], 4
      %s38 = int_to_ptr.vmem [resolvable:$true] %s37
      %43 = dma.hbm_to_vmem [thread:$0]  %s4, 16384, %s38, [#allocation6], 256, 256, 16
    $region21: #{tpu_custom_call.1} parent=1 // pred_fallthru
      _
    // Predicated region
    $region22: #{tpu_custom_call.1} parent=1 // pred_check
      _
    $region23: #{tpu_custom_call.1} parent=1 // pred_check_branch
      %45 = sbr.rel (0) target = $region25
    $region24: #{tpu_custom_call.1} parent=1 // pred_region
      _
    $region25: #{tpu_custom_call.1} parent=1 // pred_fallthru
      _
    // Predicated region
    $region26: #{tpu_custom_call.1} parent=1 // pred_check
      _
    $region27: #{tpu_custom_call.1} parent=1 // pred_check_branch
      %47 = sbr.rel (0) target = $region29
    $region28: #{tpu_custom_call.1} parent=1 // pred_region
      %48 = dma.done [#allocation3], 4096
    $region29: #{tpu_custom_call.1} parent=1 // pred_fallthru
      _
    // Predicated region
    $region30: #{tpu_custom_call.1} parent=1 // pred_check
      _
    $region31: #{tpu_custom_call.1} parent=1 // pred_check_branch
      %50 = sbr.rel (0) target = $region33
    $region32: #{tpu_custom_call.1} parent=1 // pred_region
      %51 = dma.done [#allocation6], 16384
    $region33: #{tpu_custom_call.1} parent=1 // pred_fallthru
      _
    %v53 = vld [vmem:[%s0] sm:$0xff]
    %v54 = vld [vmem:[%s1] sm:$0x1]
    %56 = vset.pattern.permute.xlu0 0
    %57 = vperm.xlu0 %56, %v53
    %v58 = vpop.permute.xlu0 %57
    %v61 = vlaneseq
    %v62 = vshrl.u32 %v61, 7
    %v63 = vsub.s32 0, %v62
    %v64 = vrot.slane %v54, %v63
    %v66 = vmul.f32 %v58, %v64
    %v67 = vlaneseq
    %v68 = vand.u32 %v67, 127
    %vm69 = vcmp.lt.s32.totalorder %v68, 64
    %v70 = vand.u32 2147483647, %v66
    %vm71 = vcmp.le.f32.partialorder %v70, 0.7853982
    %vm72 = vcmp.lt.s32.totalorder %v66, 0
    %v73 = vand.u32 %v66, 2139095040
    %v74 = vshrl.u32 %v73, 23
    %v75 = vsub.s32 %v74, 127
    %v76 = vand.u32 2147483647, %v66
    %v77 = vand.u32 %v76, 8388607
    %v78 = vor.u32 %v77, 8388608
    %v79 = vsub.s32 0, %v78
    %v80 = vadd.s32 %v75, 1
    %vm81 = vcmp.gt.s32.totalorder %v80, 0
    %v82 = vsel %vm81, %v80, 0
    %v83 = vshrl.u32 %v82, 5
    %v84 = vand.u32 %v82, 31
    %v85 = vsub.s32 32, %v84
    %v86 = vshrl.u32 683565275, %v85
    %v87 = vshll.u32 683565275, %v84
    %v88 = vshrl.u32 2475754826, %v85
    %v89 = vor.u32 %v87, %v88
    %v90 = vshll.u32 2475754826, %v84
    %v91 = vshrl.u32 2131351028, %v85
    %v92 = vor.u32 %v90, %v91
    %v93 = vshll.u32 2131351028, %v84
    %v94 = vshrl.u32 2102212464, %v85
    %v95 = vor.u32 %v93, %v94
    %v96 = vshll.u32 2102212464, %v84
    %v97 = vshrl.u32 920167782, %v85
    %v98 = vor.u32 %v96, %v97
    %v99 = vshll.u32 920167782, %v84
    %v100 = vshrl.u32 1326507024, %v85
    %v101 = vor.u32 %v99, %v100
    %vm102 = vcmp.lt.s32.totalorder %v83, 1
    %vm103 = vcmp.lt.s32.totalorder %v83, 2
    %vm104 = vcmp.lt.s32.totalorder %v83, 3
    %vm105 = vcmp.lt.s32.totalorder %v83, 4
    %v106 = vsel %vm102, %v86, %v89
    %v107 = vsel %vm105, %v95, 2102212464
    %v108 = vsel %vm104, %v92, %v107
    %v109 = vsel %vm103, %v106, %v108
    %v110 = vsel %vm102, %v89, %v92
    %v111 = vsel %vm105, %v98, 920167782
    %v112 = vsel %vm104, %v95, %v111
    %v113 = vsel %vm103, %v110, %v112
    %v114 = vsel %vm102, %v92, %v95
    %v115 = vsel %vm105, %v101, 1326507024
    %v116 = vsel %vm104, %v98, %v115
    %v117 = vsel %vm103, %v114, %v116
    %v118 = vshll.u32 %v78, 8
    %v119 = vmul.u32.u64.compose %v118, %v117
    %v120 = vextract.low.u32 %v119
    %v121 = vextract.high.u32 %v119
    %v122 = vmul.u32.u64.compose %v118, %v113
    %v123 = vextract.low.u32 %v122
    %v124 = vextract.high.u32 %v122
    %v125 = vmul.u32 %v118, %v109
    %v126 = vadd.s32 %v121, %v123
    %vm127 = vc.u32 %v121, %v123
    %v128 = vadd.s32 %v124, 1
    %v129 = vsel %vm127, %v128, %v124
    %v130 = vadd.s32 %v125, %v129
    %v131 = vadd.s32 %v130, 536870912
    %v132 = vshrl.u32 %v131, 30
    %v133 = vshll.u32 %v132, 30
    %v134 = vsub.s32 %v130, %v133
    %vm135 = vcmp.lt.s32.totalorder %v134, 0
    %v136 = vsub.s32 0, %v134
    %v137 = vsel %vm135, %v136, %v134
    %v138 = vclz %v137
    %v139 = vsub.s32 %v138, 2
    %vm140 = vcmp.gt.s32.totalorder 0, %v139
    %v141 = vsel %vm140, 0, %v139
    %v142 = vsub.s32 32, %v141
    %v143 = vshll.u32 %v134, %v141
    %v144 = vshrl.u32 %v126, %v142
    %v145 = vor.u32 %v143, %v144
    %v146 = vsub.s32 4294967266, %v141
    %v147 = vadd.s32 %v146, 127
    %v148 = vshll.u32 %v147, 23
    %v149 = vor.u32 4788187, %v148
    %v150 = vand.u32 2147483647, %v149
    %v152 = vcvt.s32.f32 %v145
    %v153 = vmul.f32 %v152, %v150
    %v154 = vxor.u32 %v153, 2147483648
    %v155 = vsel %vm72, %v154, %v153
    %v156 = vsub.s32 4, %v132
    %v157 = vsel %vm72, %v156, %v132
    %v158 = vsel %vm71, %v66, %v155
    %v159 = vsel %vm71, 0, %v157
    %v160 = vcosq.f32.pop %v158
    %v161 = vsinq.f32.pop %v158
    %vm162 = vweird.f32 %v66
    %v163 = vadd.s32 %v159, 3
    %v164 = vand.u32 %v163, 3
    %vm165 = vcmp.lt.s32.totalorder %v164, 2
    %vm166 = vcmp.eq.s32.totalorder %v164, 0
    %v167 = vxor.u32 %v161, 2147483648
    %v168 = vsel %vm166, %v160, %v167
    %vm169 = vcmp.eq.s32.totalorder %v164, 2
    %v170 = vxor.u32 %v160, 2147483648
    %v171 = vsel %vm169, %v170, %v161
    %v172 = vsel %vm165, %v168, %v171
    %v173 = vsel %vm162, nan, %v172
    %v174 = vand.u32 2147483647, %v66
    %vm175 = vcmp.le.f32.partialorder %v174, 0.7853982
    %vm176 = vcmp.lt.s32.totalorder %v66, 0
    %v177 = vand.u32 %v66, 2139095040
    %v178 = vshrl.u32 %v177, 23
    %v179 = vsub.s32 %v178, 127
    %v180 = vand.u32 2147483647, %v66
    %v181 = vand.u32 %v180, 8388607
    %v182 = vor.u32 %v181, 8388608
    %v183 = vsub.s32 0, %v182
    %v184 = vadd.s32 %v179, 1
    %vm185 = vcmp.gt.s32.totalorder %v184, 0
    %v186 = vsel %vm185, %v184, 0
    %v187 = vshrl.u32 %v186, 5
    %v188 = vand.u32 %v186, 31
    %v189 = vsub.s32 32, %v188
    %v190 = vshrl.u32 683565275, %v189
    %v191 = vshll.u32 683565275, %v188
    %v192 = vshrl.u32 2475754826, %v189
    %v193 = vor.u32 %v191, %v192
    %v194 = vshll.u32 2475754826, %v188
    %v195 = vshrl.u32 2131351028, %v189
    %v196 = vor.u32 %v194, %v195
    %v197 = vshll.u32 2131351028, %v188
    %v198 = vshrl.u32 2102212464, %v189
    %v199 = vor.u32 %v197, %v198
    %v200 = vshll.u32 2102212464, %v188
    %v201 = vshrl.u32 920167782, %v189
    %v202 = vor.u32 %v200, %v201
    %v203 = vshll.u32 920167782, %v188
    %v204 = vshrl.u32 1326507024, %v189
    %v205 = vor.u32 %v203, %v204
    %vm206 = vcmp.lt.s32.totalorder %v187, 1
    %vm207 = vcmp.lt.s32.totalorder %v187, 2
    %vm208 = vcmp.lt.s32.totalorder %v187, 3
    %vm209 = vcmp.lt.s32.totalorder %v187, 4
    %v210 = vsel %vm206, %v190, %v193
    %v211 = vsel %vm209, %v199, 2102212464
    %v212 = vsel %vm208, %v196, %v211
    %v213 = vsel %vm207, %v210, %v212
    %v214 = vsel %vm206, %v193, %v196
    %v215 = vsel %vm209, %v202, 920167782
    %v216 = vsel %vm208, %v199, %v215
    %v217 = vsel %vm207, %v214, %v216
    %v218 = vsel %vm206, %v196, %v199
    %v219 = vsel %vm209, %v205, 1326507024
    %v220 = vsel %vm208, %v202, %v219
    %v221 = vsel %vm207, %v218, %v220
    %v222 = vshll.u32 %v182, 8
    %v223 = vmul.u32.u64.compose %v222, %v221
    %v224 = vextract.low.u32 %v223
    %v225 = vextract.high.u32 %v223
    %v226 = vmul.u32.u64.compose %v222, %v217
    %v227 = vextract.low.u32 %v226
    %v228 = vextract.high.u32 %v226
    %v229 = vmul.u32 %v222, %v213
    %v230 = vadd.s32 %v225, %v227
    %vm231 = vc.u32 %v225, %v227
    %v232 = vadd.s32 %v228, 1
    %v233 = vsel %vm231, %v232, %v228
    %v234 = vadd.s32 %v229, %v233
    %v235 = vadd.s32 %v234, 536870912
    %v236 = vshrl.u32 %v235, 30
    %v237 = vshll.u32 %v236, 30
    %v238 = vsub.s32 %v234, %v237
    %vm239 = vcmp.lt.s32.totalorder %v238, 0
    %v240 = vsub.s32 0, %v238
    %v241 = vsel %vm239, %v240, %v238
    %v242 = vclz %v241
    %v243 = vsub.s32 %v242, 2
    %vm244 = vcmp.gt.s32.totalorder 0, %v243
    %v245 = vsel %vm244, 0, %v243
    %v246 = vsub.s32 32, %v245
    %v247 = vshll.u32 %v238, %v245
    %v248 = vshrl.u32 %v230, %v246
    %v249 = vor.u32 %v247, %v248
    %v250 = vsub.s32 4294967266, %v245
    %v251 = vadd.s32 %v250, 127
    %v252 = vshll.u32 %v251, 23
    %v253 = vor.u32 4788187, %v252
    %v254 = vand.u32 2147483647, %v253
    %v256 = vcvt.s32.f32 %v249
    %v257 = vmul.f32 %v256, %v254
    %v258 = vxor.u32 %v257, 2147483648
    %v259 = vsel %vm176, %v258, %v257
    %v260 = vsub.s32 4, %v236
    %v261 = vsel %vm176, %v260, %v236
    %v262 = vsel %vm175, %v66, %v259
    %v263 = vsel %vm175, 0, %v261
    %v264 = vcosq.f32.pop %v262
    %v265 = vsinq.f32.pop %v262
    %vm266 = vweird.f32 %v66
    %v267 = vand.u32 %v263, 3
    %vm268 = vcmp.lt.s32.totalorder %v267, 2
    %vm269 = vcmp.eq.s32.totalorder %v267, 0
    %v270 = vxor.u32 %v265, 2147483648
    %v271 = vsel %vm269, %v264, %v270
    %vm272 = vcmp.eq.s32.totalorder %v267, 2
    %v273 = vxor.u32 %v264, 2147483648
    %v274 = vsel %vm272, %v273, %v265
    %v275 = vsel %vm268, %v271, %v274
    %v276 = vsel %vm266, nan, %v275
    %v277 = vsel %vm69, %v173, %v276
    %v278 = vpack.c.bf16 %v277, %v277
    %v279 = vld [vmem:[#allocation2] sm:$0xff]
    %v280 = vld [vmem:[#allocation2 + $0x8] sm:$0xff]
    %v281 = vld [vmem:[#allocation2 + $0x10] sm:$0xff]
    %v282 = vld [vmem:[#allocation2 + $0x18] sm:$0xff]
    %v283 = vld [vmem:[#allocation2 + $0x20] sm:$0xff]
    %v284 = vld [vmem:[#allocation2 + $0x28] sm:$0xff]
    %v285 = vld [vmem:[#allocation2 + $0x30] sm:$0xff]
    %v286 = vld [vmem:[#allocation2 + $0x38] sm:$0xff]
    %v287 = vld [vmem:[#allocation2 + $0x40] sm:$0xff]
    %v288 = vld [vmem:[#allocation2 + $0x48] sm:$0xff]
    %v289 = vld [vmem:[#allocation2 + $0x50] sm:$0xff]
    %v290 = vld [vmem:[#allocation2 + $0x58] sm:$0xff]
    %v291 = vld [vmem:[#allocation2 + $0x60] sm:$0xff]
    %v292 = vld [vmem:[#allocation2 + $0x68] sm:$0xff]
    %v293 = vld [vmem:[#allocation2 + $0x70] sm:$0xff]
    %v294 = vld [vmem:[#allocation2 + $0x78] sm:$0xff]
    %v295 = vld [vmem:[#allocation2 + $0x80] sm:$0xff]
    %v296 = vld [vmem:[#allocation2 + $0x88] sm:$0xff]
    %v297 = vld [vmem:[#allocation2 + $0x90] sm:$0xff]
    %v298 = vld [vmem:[#allocation2 + $0x98] sm:$0xff]
    %v299 = vld [vmem:[#allocation2 + $0xa0] sm:$0xff]
    %v300 = vld [vmem:[#allocation2 + $0xa8] sm:$0xff]
    %v301 = vld [vmem:[#allocation2 + $0xb0] sm:$0xff]
    %v302 = vld [vmem:[#allocation2 + $0xb8] sm:$0xff]
    %v303 = vld [vmem:[#allocation2 + $0xc0] sm:$0xff]
    %v304 = vld [vmem:[#allocation2 + $0xc8] sm:$0xff]
    %v305 = vld [vmem:[#allocation2 + $0xd0] sm:$0xff]
    %v306 = vld [vmem:[#allocation2 + $0xd8] sm:$0xff]
    %v307 = vld [vmem:[#allocation2 + $0xe0] sm:$0xff]
    %v308 = vld [vmem:[#allocation2 + $0xe8] sm:$0xff]
    %v309 = vld [vmem:[#allocation2 + $0xf0] sm:$0xff]
    %v310 = vld [vmem:[#allocation2 + $0xf8] sm:$0xff]
    %v311 = vld [vmem:[%s3] sm:$0xf]
    %v313 = vlaneseq
    %v314 = vshrl.u32 %v313, 7
    %v315 = vsub.s32 0, %v314
    %v316 = vrot.slane %v311, %v315
    %v317 = vlaneseq
    %v318 = vshrl.u32 %v317, 7
    %v319 = vsub.s32 1, %v318
    %v320 = vrot.slane %v311, %v319
    %v321 = vlaneseq
    %v322 = vshrl.u32 %v321, 7
    %v323 = vsub.s32 2, %v322
    %v324 = vrot.slane %v311, %v323
    %v325 = vlaneseq
    %v326 = vshrl.u32 %v325, 7
    %v327 = vsub.s32 3, %v326
    %v328 = vrot.slane %v311, %v327
    %v365 = vunpack.c.l.b16 %v279
    %v366 = vunpack.c.h.b16 %v279
    %v367 = vunpack.c.l.b16 %v280
    %v368 = vunpack.c.h.b16 %v280
    %v369 = vunpack.c.l.b16 %v281
    %v370 = vunpack.c.h.b16 %v281
    %v371 = vunpack.c.l.b16 %v282
    %v372 = vunpack.c.h.b16 %v282
    %v373 = vunpack.c.l.b16 %v283
    %v374 = vunpack.c.h.b16 %v283
    %v375 = vunpack.c.l.b16 %v284
    %v376 = vunpack.c.h.b16 %v284
    %v377 = vunpack.c.l.b16 %v285
    %v378 = vunpack.c.h.b16 %v285
    %v379 = vunpack.c.l.b16 %v286
    %v380 = vunpack.c.h.b16 %v286
    %v381 = vunpack.c.l.b16 %v287
    %v382 = vunpack.c.h.b16 %v287
    %v383 = vunpack.c.l.b16 %v288
    %v384 = vunpack.c.h.b16 %v288
    %v385 = vunpack.c.l.b16 %v289
    %v386 = vunpack.c.h.b16 %v289
    %v387 = vunpack.c.l.b16 %v290
    %v388 = vunpack.c.h.b16 %v290
    %v389 = vunpack.c.l.b16 %v291
    %v390 = vunpack.c.h.b16 %v291
    %v391 = vunpack.c.l.b16 %v292
    %v392 = vunpack.c.h.b16 %v292
    %v393 = vunpack.c.l.b16 %v293
    %v394 = vunpack.c.h.b16 %v293
    %v395 = vunpack.c.l.b16 %v294
    %v396 = vunpack.c.h.b16 %v294
    %v397 = vunpack.c.l.b16 %v295
    %v398 = vunpack.c.h.b16 %v295
    %v399 = vunpack.c.l.b16 %v296
    %v400 = vunpack.c.h.b16 %v296
    %v401 = vunpack.c.l.b16 %v297
    %v402 = vunpack.c.h.b16 %v297
    %v403 = vunpack.c.l.b16 %v298
    %v404 = vunpack.c.h.b16 %v298
    %v405 = vunpack.c.l.b16 %v299
    %v406 = vunpack.c.h.b16 %v299
    %v407 = vunpack.c.l.b16 %v300
    %v408 = vunpack.c.h.b16 %v300
    %v409 = vunpack.c.l.b16 %v301
    %v410 = vunpack.c.h.b16 %v301
    %v411 = vunpack.c.l.b16 %v302
    %v412 = vunpack.c.h.b16 %v302
    %v413 = vunpack.c.l.b16 %v303
    %v414 = vunpack.c.h.b16 %v303
    %v415 = vunpack.c.l.b16 %v304
    %v416 = vunpack.c.h.b16 %v304
    %v417 = vunpack.c.l.b16 %v305
    %v418 = vunpack.c.h.b16 %v305
    %v419 = vunpack.c.l.b16 %v306
    %v420 = vunpack.c.h.b16 %v306
    %v421 = vunpack.c.l.b16 %v307
    %v422 = vunpack.c.h.b16 %v307
    %v423 = vunpack.c.l.b16 %v308
    %v424 = vunpack.c.h.b16 %v308
    %v425 = vunpack.c.l.b16 %v309
    %v426 = vunpack.c.h.b16 %v309
    %v427 = vunpack.c.l.b16 %v310
    %v428 = vunpack.c.h.b16 %v310
    %v429 = vpack.c.b16 %v369, %v365
    %v430 = vpack.c.b16 %v370, %v366
    %v431 = vpack.c.b16 %v371, %v367
    %v432 = vpack.c.b16 %v372, %v368
    %v433 = vpack.c.b16 %v377, %v373
    %v434 = vpack.c.b16 %v378, %v374
    %v435 = vpack.c.b16 %v379, %v375
    %v436 = vpack.c.b16 %v380, %v376
    %v437 = vpack.c.b16 %v385, %v381
    %v438 = vpack.c.b16 %v386, %v382
    %v439 = vpack.c.b16 %v387, %v383
    %v440 = vpack.c.b16 %v388, %v384
    %v441 = vpack.c.b16 %v393, %v389
    %v442 = vpack.c.b16 %v394, %v390
    %v443 = vpack.c.b16 %v395, %v391
    %v444 = vpack.c.b16 %v396, %v392
    %v445 = vpack.c.b16 %v401, %v397
    %v446 = vpack.c.b16 %v402, %v398
    %v447 = vpack.c.b16 %v403, %v399
    %v448 = vpack.c.b16 %v404, %v400
    %v449 = vpack.c.b16 %v409, %v405
    %v450 = vpack.c.b16 %v410, %v406
    %v451 = vpack.c.b16 %v411, %v407
    %v452 = vpack.c.b16 %v412, %v408
    %v453 = vpack.c.b16 %v417, %v413
    %v454 = vpack.c.b16 %v418, %v414
    %v455 = vpack.c.b16 %v419, %v415
    %v456 = vpack.c.b16 %v420, %v416
    %v457 = vpack.c.b16 %v425, %v421
    %v458 = vpack.c.b16 %v426, %v422
    %v459 = vpack.c.b16 %v427, %v423
    %v460 = vpack.c.b16 %v428, %v424
    %493 = vmatprep.subr.bf16.mxu0 %v430
    %494 = vmatpush1.bf16.msra.mxu0 %v429
    %495 = vmatprep.subr.bf16.mxu0 %v434
    %496 = vmatpush1.bf16.msra.mxu0 %v433
    %497 = vmatprep.subr.bf16.mxu0 %v438
    %498 = vmatpush1.bf16.msra.mxu0 %v437
    %499 = vmatprep.subr.bf16.mxu0 %v442
    %500 = vmatpush1.bf16.msra.mxu0 %v441
    %501 = vmatprep.subr.bf16.mxu0 %v446
    %502 = vmatpush1.bf16.msra.mxu0 %v445
    %503 = vmatprep.subr.bf16.mxu0 %v450
    %504 = vmatpush1.bf16.msra.mxu0 %v449
    %505 = vmatprep.subr.bf16.mxu0 %v454
    %506 = vmatpush1.bf16.msra.mxu0 %v453
    %507 = vmatprep.subr.bf16.mxu0 %v458
    %508 = vmatpush1.bf16.msra.mxu0 %v457
    %509 = vmatprep.subr.bf16.mxu0 0
    %510 = vmatpush1.bf16.msra.mxu0 0
    %511 = vmatprep.subr.bf16.mxu0 0
    %512 = vmatpush1.bf16.msra.mxu0 0
    %513 = vmatprep.subr.bf16.mxu0 0
    %514 = vmatpush1.bf16.msra.mxu0 0
    %515 = vmatprep.subr.bf16.mxu0 0
    %516 = vmatpush1.bf16.msra.mxu0 0
    %517 = vmatprep.subr.bf16.mxu0 0
    %518 = vmatpush1.bf16.msra.mxu0 0
    %519 = vmatprep.subr.bf16.mxu0 0
    %520 = vmatpush1.bf16.msra.mxu0 0
    %521 = vmatprep.subr.bf16.mxu0 0
    %522 = vmatpush1.bf16.msra.mxu0 0
    %523 = vmatprep.subr.bf16.mxu0 0
    %524 = vmatpush1.bf16.msra.mxu0 0
    %525 = vmatprep.mubr.bf16.mxu0 0
    %526 = vmatmul.mubr.bf16.gmra.mrb[0].mxu0 %v278
    %v527 = vpop.f32.mrb[0].mxu0
    %v528 = vadd.f32 %v316, %v527
    %v529 = vpop.f32.mrb[0].mxu0
    %v530 = vadd.f32 %v320, %v529
    %v531 = vpop.f32.mrb[0].mxu0
    %v532 = vpop.f32.mrb[0].mxu0
    %533 = vdwg.mxu0
    %534 = vmatprep.subr.bf16.mxu0 %v432
    %535 = vmatpush1.bf16.msra.mxu0 %v431
    %536 = vmatprep.subr.bf16.mxu0 %v436
    %537 = vmatpush1.bf16.msra.mxu0 %v435
    %538 = vmatprep.subr.bf16.mxu0 %v440
    %539 = vmatpush1.bf16.msra.mxu0 %v439
    %540 = vmatprep.subr.bf16.mxu0 %v444
    %541 = vmatpush1.bf16.msra.mxu0 %v443
    %542 = vmatprep.subr.bf16.mxu0 %v448
    %543 = vmatpush1.bf16.msra.mxu0 %v447
    %544 = vmatprep.subr.bf16.mxu0 %v452
    %545 = vmatpush1.bf16.msra.mxu0 %v451
    %546 = vmatprep.subr.bf16.mxu0 %v456
    %547 = vmatpush1.bf16.msra.mxu0 %v455
    %548 = vmatprep.subr.bf16.mxu0 %v460
    %549 = vmatpush1.bf16.msra.mxu0 %v459
    %550 = vmatprep.subr.bf16.mxu0 0
    %551 = vmatpush1.bf16.msra.mxu0 0
    %552 = vmatprep.subr.bf16.mxu0 0
    %553 = vmatpush1.bf16.msra.mxu0 0
    %554 = vmatprep.subr.bf16.mxu0 0
    %555 = vmatpush1.bf16.msra.mxu0 0
    %556 = vmatprep.subr.bf16.mxu0 0
    %557 = vmatpush1.bf16.msra.mxu0 0
    %558 = vmatprep.subr.bf16.mxu0 0
    %559 = vmatpush1.bf16.msra.mxu0 0
    %560 = vmatprep.subr.bf16.mxu0 0
    %561 = vmatpush1.bf16.msra.mxu0 0
    %562 = vmatprep.subr.bf16.mxu0 0
    %563 = vmatpush1.bf16.msra.mxu0 0
    %564 = vmatprep.subr.bf16.mxu0 0
    %565 = vmatpush1.bf16.msra.mxu0 0
    %566 = vmatprep.mubr.bf16.mxu0 0
    %567 = vmatmul.mubr.bf16.gmra.mrb[0].mxu0 %v278
    %v568 = vpop.f32.mrb[0].mxu0
    %v569 = vadd.f32 %v324, %v568
    %v570 = vpop.f32.mrb[0].mxu0
    %v571 = vadd.f32 %v328, %v570
    %v572 = vpop.f32.mrb[0].mxu0
    %v573 = vpop.f32.mrb[0].mxu0
    %574 = vdwg.mxu0
    %v575 = vxor.u32 %v528, 2147483648
    %v576 = vxor.u32 %v530, 2147483648
    %v577 = vxor.u32 %v569, 2147483648
    %v578 = vxor.u32 %v571, 2147483648
    %v579 = vmul.f32 %v575, 1.442695
    %v580 = vpow.pop %v579
    %v581 = vmul.f32 %v576, 1.442695
    %v582 = vpow.pop %v581
    %v583 = vmul.f32 %v577, 1.442695
    %v584 = vpow.pop %v583
    %v585 = vmul.f32 %v578, 1.442695
    %v586 = vpow.pop %v585
    %v587 = vadd.f32 %v580, 1.0
    %v588 = vadd.f32 %v582, 1.0
    %v589 = vadd.f32 %v584, 1.0
    %v590 = vadd.f32 %v586, 1.0
    %v591 = vrcp.pop %v587
    %v592 = vmul.f32 1.0, %v591
    %v593 = vrcp.pop %v588
    %v594 = vmul.f32 1.0, %v593
    %v595 = vrcp.pop %v589
    %v596 = vmul.f32 1.0, %v595
    %v597 = vrcp.pop %v590
    %v598 = vmul.f32 1.0, %v597
    %v599 = vmul.f32 %v528, %v592
    %v600 = vmul.f32 %v530, %v594
    %v601 = vmul.f32 %v569, %v596
    %v602 = vmul.f32 %v571, %v598
    %v603 = vpack.c.bf16 %v599, %v599
    %v604 = vpack.c.bf16 %v600, %v600
    %v605 = vpack.c.bf16 %v601, %v601
    %v606 = vpack.c.bf16 %v602, %v602
    %v607 = vld [vmem:[#allocation5] sm:$0xff]
    %v608 = vld [vmem:[#allocation5 + $0x8] sm:$0xff]
    %v609 = vld [vmem:[#allocation5 + $0x10] sm:$0xff]
    %v610 = vld [vmem:[#allocation5 + $0x18] sm:$0xff]
    %v611 = vld [vmem:[#allocation5 + $0x20] sm:$0xff]
    %v612 = vld [vmem:[#allocation5 + $0x28] sm:$0xff]
    %v613 = vld [vmem:[#allocation5 + $0x30] sm:$0xff]
    %v614 = vld [vmem:[#allocation5 + $0x38] sm:$0xff]
    %v615 = vld [vmem:[#allocation5 + $0x40] sm:$0xff]
    %v616 = vld [vmem:[#allocation5 + $0x48] sm:$0xff]
    %v617 = vld [vmem:[#allocation5 + $0x50] sm:$0xff]
    %v618 = vld [vmem:[#allocation5 + $0x58] sm:$0xff]
    %v619 = vld [vmem:[#allocation5 + $0x60] sm:$0xff]
    %v620 = vld [vmem:[#allocation5 + $0x68] sm:$0xff]
    %v621 = vld [vmem:[#allocation5 + $0x70] sm:$0xff]
    %v622 = vld [vmem:[#allocation5 + $0x78] sm:$0xff]
    %v623 = vld [vmem:[#allocation5 + $0x80] sm:$0xff]
    %v624 = vld [vmem:[#allocation5 + $0x88] sm:$0xff]
    %v625 = vld [vmem:[#allocation5 + $0x90] sm:$0xff]
    %v626 = vld [vmem:[#allocation5 + $0x98] sm:$0xff]
    %v627 = vld [vmem:[#allocation5 + $0xa0] sm:$0xff]
    %v628 = vld [vmem:[#allocation5 + $0xa8] sm:$0xff]
    %v629 = vld [vmem:[#allocation5 + $0xb0] sm:$0xff]
    %v630 = vld [vmem:[#allocation5 + $0xb8] sm:$0xff]
    %v631 = vld [vmem:[#allocation5 + $0xc0] sm:$0xff]
    %v632 = vld [vmem:[#allocation5 + $0xc8] sm:$0xff]
    %v633 = vld [vmem:[#allocation5 + $0xd0] sm:$0xff]
    %v634 = vld [vmem:[#allocation5 + $0xd8] sm:$0xff]
    %v635 = vld [vmem:[#allocation5 + $0xe0] sm:$0xff]
    %v636 = vld [vmem:[#allocation5 + $0xe8] sm:$0xff]
    %v637 = vld [vmem:[#allocation5 + $0xf0] sm:$0xff]
    %v638 = vld [vmem:[#allocation5 + $0xf8] sm:$0xff]
    %v639 = vld [vmem:[#allocation5 + $0x100] sm:$0xff]
    %v640 = vld [vmem:[#allocation5 + $0x108] sm:$0xff]
    %v641 = vld [vmem:[#allocation5 + $0x110] sm:$0xff]
    %v642 = vld [vmem:[#allocation5 + $0x118] sm:$0xff]
    %v643 = vld [vmem:[#allocation5 + $0x120] sm:$0xff]
    %v644 = vld [vmem:[#allocation5 + $0x128] sm:$0xff]
    %v645 = vld [vmem:[#allocation5 + $0x130] sm:$0xff]
    %v646 = vld [vmem:[#allocation5 + $0x138] sm:$0xff]
    %v647 = vld [vmem:[#allocation5 + $0x140] sm:$0xff]
    %v648 = vld [vmem:[#allocation5 + $0x148] sm:$0xff]
    %v649 = vld [vmem:[#allocation5 + $0x150] sm:$0xff]
    %v650 = vld [vmem:[#allocation5 + $0x158] sm:$0xff]
    %v651 = vld [vmem:[#allocation5 + $0x160] sm:$0xff]
    %v652 = vld [vmem:[#allocation5 + $0x168] sm:$0xff]
    %v653 = vld [vmem:[#allocation5 + $0x170] sm:$0xff]
    %v654 = vld [vmem:[#allocation5 + $0x178] sm:$0xff]
    %v655 = vld [vmem:[#allocation5 + $0x180] sm:$0xff]
    %v656 = vld [vmem:[#allocation5 + $0x188] sm:$0xff]
    %v657 = vld [vmem:[#allocation5 + $0x190] sm:$0xff]
    %v658 = vld [vmem:[#allocation5 + $0x198] sm:$0xff]
    %v659 = vld [vmem:[#allocation5 + $0x1a0] sm:$0xff]
    %v660 = vld [vmem:[#allocation5 + $0x1a8] sm:$0xff]
    %v661 = vld [vmem:[#allocation5 + $0x1b0] sm:$0xff]
    %v662 = vld [vmem:[#allocation5 + $0x1b8] sm:$0xff]
    %v663 = vld [vmem:[#allocation5 + $0x1c0] sm:$0xff]
    %v664 = vld [vmem:[#allocation5 + $0x1c8] sm:$0xff]
    %v665 = vld [vmem:[#allocation5 + $0x1d0] sm:$0xff]
    %v666 = vld [vmem:[#allocation5 + $0x1d8] sm:$0xff]
    %v667 = vld [vmem:[#allocation5 + $0x1e0] sm:$0xff]
    %v668 = vld [vmem:[#allocation5 + $0x1e8] sm:$0xff]
    %v669 = vld [vmem:[#allocation5 + $0x1f0] sm:$0xff]
    %v670 = vld [vmem:[#allocation5 + $0x1f8] sm:$0xff]
    %v671 = vld [vmem:[#allocation5 + $0x200] sm:$0xff]
    %v672 = vld [vmem:[#allocation5 + $0x208] sm:$0xff]
    %v673 = vld [vmem:[#allocation5 + $0x210] sm:$0xff]
    %v674 = vld [vmem:[#allocation5 + $0x218] sm:$0xff]
    %v675 = vld [vmem:[#allocation5 + $0x220] sm:$0xff]
    %v676 = vld [vmem:[#allocation5 + $0x228] sm:$0xff]
    %v677 = vld [vmem:[#allocation5 + $0x230] sm:$0xff]
    %v678 = vld [vmem:[#allocation5 + $0x238] sm:$0xff]
    %v679 = vld [vmem:[#allocation5 + $0x240] sm:$0xff]
    %v680 = vld [vmem:[#allocation5 + $0x248] sm:$0xff]
    %v681 = vld [vmem:[#allocation5 + $0x250] sm:$0xff]
    %v682 = vld [vmem:[#allocation5 + $0x258] sm:$0xff]
    %v683 = vld [vmem:[#allocation5 + $0x260] sm:$0xff]
    %v684 = vld [vmem:[#allocation5 + $0x268] sm:$0xff]
    %v685 = vld [vmem:[#allocation5 + $0x270] sm:$0xff]
    %v686 = vld [vmem:[#allocation5 + $0x278] sm:$0xff]
    %v687 = vld [vmem:[#allocation5 + $0x280] sm:$0xff]
    %v688 = vld [vmem:[#allocation5 + $0x288] sm:$0xff]
    %v689 = vld [vmem:[#allocation5 + $0x290] sm:$0xff]
    %v690 = vld [vmem:[#allocation5 + $0x298] sm:$0xff]
    %v691 = vld [vmem:[#allocation5 + $0x2a0] sm:$0xff]
    %v692 = vld [vmem:[#allocation5 + $0x2a8] sm:$0xff]
    %v693 = vld [vmem:[#allocation5 + $0x2b0] sm:$0xff]
    %v694 = vld [vmem:[#allocation5 + $0x2b8] sm:$0xff]
    %v695 = vld [vmem:[#allocation5 + $0x2c0] sm:$0xff]
    %v696 = vld [vmem:[#allocation5 + $0x2c8] sm:$0xff]
    %v697 = vld [vmem:[#allocation5 + $0x2d0] sm:$0xff]
    %v698 = vld [vmem:[#allocation5 + $0x2d8] sm:$0xff]
    %v699 = vld [vmem:[#allocation5 + $0x2e0] sm:$0xff]
    %v700 = vld [vmem:[#allocation5 + $0x2e8] sm:$0xff]
    %v701 = vld [vmem:[#allocation5 + $0x2f0] sm:$0xff]
    %v702 = vld [vmem:[#allocation5 + $0x2f8] sm:$0xff]
    %v703 = vld [vmem:[#allocation5 + $0x300] sm:$0xff]
    %v704 = vld [vmem:[#allocation5 + $0x308] sm:$0xff]
    %v705 = vld [vmem:[#allocation5 + $0x310] sm:$0xff]
    %v706 = vld [vmem:[#allocation5 + $0x318] sm:$0xff]
    %v707 = vld [vmem:[#allocation5 + $0x320] sm:$0xff]
    %v708 = vld [vmem:[#allocation5 + $0x328] sm:$0xff]
    %v709 = vld [vmem:[#allocation5 + $0x330] sm:$0xff]
    %v710 = vld [vmem:[#allocation5 + $0x338] sm:$0xff]
    %v711 = vld [vmem:[#allocation5 + $0x340] sm:$0xff]
    %v712 = vld [vmem:[#allocation5 + $0x348] sm:$0xff]
    %v713 = vld [vmem:[#allocation5 + $0x350] sm:$0xff]
    %v714 = vld [vmem:[#allocation5 + $0x358] sm:$0xff]
    %v715 = vld [vmem:[#allocation5 + $0x360] sm:$0xff]
    %v716 = vld [vmem:[#allocation5 + $0x368] sm:$0xff]
    %v717 = vld [vmem:[#allocation5 + $0x370] sm:$0xff]
    %v718 = vld [vmem:[#allocation5 + $0x378] sm:$0xff]
    %v719 = vld [vmem:[#allocation5 + $0x380] sm:$0xff]
    %v720 = vld [vmem:[#allocation5 + $0x388] sm:$0xff]
    %v721 = vld [vmem:[#allocation5 + $0x390] sm:$0xff]
    %v722 = vld [vmem:[#allocation5 + $0x398] sm:$0xff]
    %v723 = vld [vmem:[#allocation5 + $0x3a0] sm:$0xff]
    %v724 = vld [vmem:[#allocation5 + $0x3a8] sm:$0xff]
    %v725 = vld [vmem:[#allocation5 + $0x3b0] sm:$0xff]
    %v726 = vld [vmem:[#allocation5 + $0x3b8] sm:$0xff]
    %v727 = vld [vmem:[#allocation5 + $0x3c0] sm:$0xff]
    %v728 = vld [vmem:[#allocation5 + $0x3c8] sm:$0xff]
    %v729 = vld [vmem:[#allocation5 + $0x3d0] sm:$0xff]
    %v730 = vld [vmem:[#allocation5 + $0x3d8] sm:$0xff]
    %v731 = vld [vmem:[#allocation5 + $0x3e0] sm:$0xff]
    %v732 = vld [vmem:[#allocation5 + $0x3e8] sm:$0xff]
    %v733 = vld [vmem:[#allocation5 + $0x3f0] sm:$0xff]
    %v734 = vld [vmem:[#allocation5 + $0x3f8] sm:$0xff]
    %v735 = vld [vmem:[%s5] sm:$0xf]
    %v737 = vlaneseq
    %v738 = vshrl.u32 %v737, 7
    %v739 = vsub.s32 0, %v738
    %v740 = vrot.slane %v735, %v739
    %v741 = vlaneseq
    %v742 = vshrl.u32 %v741, 7
    %v743 = vsub.s32 1, %v742
    %v744 = vrot.slane %v735, %v743
    %v745 = vlaneseq
    %v746 = vshrl.u32 %v745, 7
    %v747 = vsub.s32 2, %v746
    %v748 = vrot.slane %v735, %v747
    %v749 = vlaneseq
    %v750 = vshrl.u32 %v749, 7
    %v751 = vsub.s32 3, %v750
    %v752 = vrot.slane %v735, %v751
    %v885 = vunpack.c.l.b16 %v607
    %v886 = vunpack.c.h.b16 %v607
    %v887 = vunpack.c.l.b16 %v608
    %v888 = vunpack.c.h.b16 %v608
    %v889 = vunpack.c.l.b16 %v609
    %v890 = vunpack.c.h.b16 %v609
    %v891 = vunpack.c.l.b16 %v610
    %v892 = vunpack.c.h.b16 %v610
    %v893 = vunpack.c.l.b16 %v611
    %v894 = vunpack.c.h.b16 %v611
    %v895 = vunpack.c.l.b16 %v612
    %v896 = vunpack.c.h.b16 %v612
    %v897 = vunpack.c.l.b16 %v613
    %v898 = vunpack.c.h.b16 %v613
    %v899 = vunpack.c.l.b16 %v614
    %v900 = vunpack.c.h.b16 %v614
    %v901 = vunpack.c.l.b16 %v615
    %v902 = vunpack.c.h.b16 %v615
    %v903 = vunpack.c.l.b16 %v616
    %v904 = vunpack.c.h.b16 %v616
    %v905 = vunpack.c.l.b16 %v617
    %v906 = vunpack.c.h.b16 %v617
    %v907 = vunpack.c.l.b16 %v618
    %v908 = vunpack.c.h.b16 %v618
    %v909 = vunpack.c.l.b16 %v619
    %v910 = vunpack.c.h.b16 %v619
    %v911 = vunpack.c.l.b16 %v620
    %v912 = vunpack.c.h.b16 %v620
    %v913 = vunpack.c.l.b16 %v621
    %v914 = vunpack.c.h.b16 %v621
    %v915 = vunpack.c.l.b16 %v622
    %v916 = vunpack.c.h.b16 %v622
    %v917 = vunpack.c.l.b16 %v623
    %v918 = vunpack.c.h.b16 %v623
    %v919 = vunpack.c.l.b16 %v624
    %v920 = vunpack.c.h.b16 %v624
    %v921 = vunpack.c.l.b16 %v625
    %v922 = vunpack.c.h.b16 %v625
    %v923 = vunpack.c.l.b16 %v626
    %v924 = vunpack.c.h.b16 %v626
    %v925 = vunpack.c.l.b16 %v627
    %v926 = vunpack.c.h.b16 %v627
    %v927 = vunpack.c.l.b16 %v628
    %v928 = vunpack.c.h.b16 %v628
    %v929 = vunpack.c.l.b16 %v629
    %v930 = vunpack.c.h.b16 %v629
    %v931 = vunpack.c.l.b16 %v630
    %v932 = vunpack.c.h.b16 %v630
    %v933 = vunpack.c.l.b16 %v631
    %v934 = vunpack.c.h.b16 %v631
    %v935 = vunpack.c.l.b16 %v632
    %v936 = vunpack.c.h.b16 %v632
    %v937 = vunpack.c.l.b16 %v633
    %v938 = vunpack.c.h.b16 %v633
    %v939 = vunpack.c.l.b16 %v634
    %v940 = vunpack.c.h.b16 %v634
    %v941 = vunpack.c.l.b16 %v635
    %v942 = vunpack.c.h.b16 %v635
    %v943 = vunpack.c.l.b16 %v636
    %v944 = vunpack.c.h.b16 %v636
    %v945 = vunpack.c.l.b16 %v637
    %v946 = vunpack.c.h.b16 %v637
    %v947 = vunpack.c.l.b16 %v638
    %v948 = vunpack.c.h.b16 %v638
    %v949 = vunpack.c.l.b16 %v639
    %v950 = vunpack.c.h.b16 %v639
    %v951 = vunpack.c.l.b16 %v640
    %v952 = vunpack.c.h.b16 %v640
    %v953 = vunpack.c.l.b16 %v641
    %v954 = vunpack.c.h.b16 %v641
    %v955 = vunpack.c.l.b16 %v642
    %v956 = vunpack.c.h.b16 %v642
    %v957 = vunpack.c.l.b16 %v643
    %v958 = vunpack.c.h.b16 %v643
    %v959 = vunpack.c.l.b16 %v644
    %v960 = vunpack.c.h.b16 %v644
    %v961 = vunpack.c.l.b16 %v645
    %v962 = vunpack.c.h.b16 %v645
    %v963 = vunpack.c.l.b16 %v646
    %v964 = vunpack.c.h.b16 %v646
    %v965 = vunpack.c.l.b16 %v647
    %v966 = vunpack.c.h.b16 %v647
    %v967 = vunpack.c.l.b16 %v648
    %v968 = vunpack.c.h.b16 %v648
    %v969 = vunpack.c.l.b16 %v649
    %v970 = vunpack.c.h.b16 %v649
    %v971 = vunpack.c.l.b16 %v650
    %v972 = vunpack.c.h.b16 %v650
    %v973 = vunpack.c.l.b16 %v651
    %v974 = vunpack.c.h.b16 %v651
    %v975 = vunpack.c.l.b16 %v652
    %v976 = vunpack.c.h.b16 %v652
    %v977 = vunpack.c.l.b16 %v653
    %v978 = vunpack.c.h.b16 %v653
    %v979 = vunpack.c.l.b16 %v654
    %v980 = vunpack.c.h.b16 %v654
    %v981 = vunpack.c.l.b16 %v655
    %v982 = vunpack.c.h.b16 %v655
    %v983 = vunpack.c.l.b16 %v656
    %v984 = vunpack.c.h.b16 %v656
    %v985 = vunpack.c.l.b16 %v657
    %v986 = vunpack.c.h.b16 %v657
    %v987 = vunpack.c.l.b16 %v658
    %v988 = vunpack.c.h.b16 %v658
    %v989 = vunpack.c.l.b16 %v659
    %v990 = vunpack.c.h.b16 %v659
    %v991 = vunpack.c.l.b16 %v660
    %v992 = vunpack.c.h.b16 %v660
    %v993 = vunpack.c.l.b16 %v661
    %v994 = vunpack.c.h.b16 %v661
    %v995 = vunpack.c.l.b16 %v662
    %v996 = vunpack.c.h.b16 %v662
    %v997 = vunpack.c.l.b16 %v663
    %v998 = vunpack.c.h.b16 %v663
    %v999 = vunpack.c.l.b16 %v664
    %v1000 = vunpack.c.h.b16 %v664
    %v1001 = vunpack.c.l.b16 %v665
    %v1002 = vunpack.c.h.b16 %v665
    %v1003 = vunpack.c.l.b16 %v666
    %v1004 = vunpack.c.h.b16 %v666
    %v1005 = vunpack.c.l.b16 %v667
    %v1006 = vunpack.c.h.b16 %v667
    %v1007 = vunpack.c.l.b16 %v668
    %v1008 = vunpack.c.h.b16 %v668
    %v1009 = vunpack.c.l.b16 %v669
    %v1010 = vunpack.c.h.b16 %v669
    %v1011 = vunpack.c.l.b16 %v670
    %v1012 = vunpack.c.h.b16 %v670
    %v1013 = vunpack.c.l.b16 %v671
    %v1014 = vunpack.c.h.b16 %v671
    %v1015 = vunpack.c.l.b16 %v672
    %v1016 = vunpack.c.h.b16 %v672
    %v1017 = vunpack.c.l.b16 %v673
    %v1018 = vunpack.c.h.b16 %v673
    %v1019 = vunpack.c.l.b16 %v674
    %v1020 = vunpack.c.h.b16 %v674
    %v1021 = vunpack.c.l.b16 %v675
    %v1022 = vunpack.c.h.b16 %v675
    %v1023 = vunpack.c.l.b16 %v676
    %v1024 = vunpack.c.h.b16 %v676
    %v1025 = vunpack.c.l.b16 %v677
    %v1026 = vunpack.c.h.b16 %v677
    %v1027 = vunpack.c.l.b16 %v678
    %v1028 = vunpack.c.h.b16 %v678
    %v1029 = vunpack.c.l.b16 %v679
    %v1030 = vunpack.c.h.b16 %v679
    %v1031 = vunpack.c.l.b16 %v680
    %v1032 = vunpack.c.h.b16 %v680
    %v1033 = vunpack.c.l.b16 %v681
    %v1034 = vunpack.c.h.b16 %v681
    %v1035 = vunpack.c.l.b16 %v682
    %v1036 = vunpack.c.h.b16 %v682
    %v1037 = vunpack.c.l.b16 %v683
    %v1038 = vunpack.c.h.b16 %v683
    %v1039 = vunpack.c.l.b16 %v684
    %v1040 = vunpack.c.h.b16 %v684
    %v1041 = vunpack.c.l.b16 %v685
    %v1042 = vunpack.c.h.b16 %v685
    %v1043 = vunpack.c.l.b16 %v686
    %v1044 = vunpack.c.h.b16 %v686
    %v1045 = vunpack.c.l.b16 %v687
    %v1046 = vunpack.c.h.b16 %v687
    %v1047 = vunpack.c.l.b16 %v688
    %v1048 = vunpack.c.h.b16 %v688
    %v1049 = vunpack.c.l.b16 %v689
    %v1050 = vunpack.c.h.b16 %v689
    %v1051 = vunpack.c.l.b16 %v690
    %v1052 = vunpack.c.h.b16 %v690
    %v1053 = vunpack.c.l.b16 %v691
    %v1054 = vunpack.c.h.b16 %v691
    %v1055 = vunpack.c.l.b16 %v692
    %v1056 = vunpack.c.h.b16 %v692
    %v1057 = vunpack.c.l.b16 %v693
    %v1058 = vunpack.c.h.b16 %v693
    %v1059 = vunpack.c.l.b16 %v694
    %v1060 = vunpack.c.h.b16 %v694
    %v1061 = vunpack.c.l.b16 %v695
    %v1062 = vunpack.c.h.b16 %v695
    %v1063 = vunpack.c.l.b16 %v696
    %v1064 = vunpack.c.h.b16 %v696
    %v1065 = vunpack.c.l.b16 %v697
    %v1066 = vunpack.c.h.b16 %v697
    %v1067 = vunpack.c.l.b16 %v698
    %v1068 = vunpack.c.h.b16 %v698
    %v1069 = vunpack.c.l.b16 %v699
    %v1070 = vunpack.c.h.b16 %v699
    %v1071 = vunpack.c.l.b16 %v700
    %v1072 = vunpack.c.h.b16 %v700
    %v1073 = vunpack.c.l.b16 %v701
    %v1074 = vunpack.c.h.b16 %v701
    %v1075 = vunpack.c.l.b16 %v702
    %v1076 = vunpack.c.h.b16 %v702
    %v1077 = vunpack.c.l.b16 %v703
    %v1078 = vunpack.c.h.b16 %v703
    %v1079 = vunpack.c.l.b16 %v704
    %v1080 = vunpack.c.h.b16 %v704
    %v1081 = vunpack.c.l.b16 %v705
    %v1082 = vunpack.c.h.b16 %v705
    %v1083 = vunpack.c.l.b16 %v706
    %v1084 = vunpack.c.h.b16 %v706
    %v1085 = vunpack.c.l.b16 %v707
    %v1086 = vunpack.c.h.b16 %v707
    %v1087 = vunpack.c.l.b16 %v708
    %v1088 = vunpack.c.h.b16 %v708
    %v1089 = vunpack.c.l.b16 %v709
    %v1090 = vunpack.c.h.b16 %v709
    %v1091 = vunpack.c.l.b16 %v710
    %v1092 = vunpack.c.h.b16 %v710
    %v1093 = vunpack.c.l.b16 %v711
    %v1094 = vunpack.c.h.b16 %v711
    %v1095 = vunpack.c.l.b16 %v712
    %v1096 = vunpack.c.h.b16 %v712
    %v1097 = vunpack.c.l.b16 %v713
    %v1098 = vunpack.c.h.b16 %v713
    %v1099 = vunpack.c.l.b16 %v714
    %v1100 = vunpack.c.h.b16 %v714
    %v1101 = vunpack.c.l.b16 %v715
    %v1102 = vunpack.c.h.b16 %v715
    %v1103 = vunpack.c.l.b16 %v716
    %v1104 = vunpack.c.h.b16 %v716
    %v1105 = vunpack.c.l.b16 %v717
    %v1106 = vunpack.c.h.b16 %v717
    %v1107 = vunpack.c.l.b16 %v718
    %v1108 = vunpack.c.h.b16 %v718
    %v1109 = vunpack.c.l.b16 %v719
    %v1110 = vunpack.c.h.b16 %v719
    %v1111 = vunpack.c.l.b16 %v720
    %v1112 = vunpack.c.h.b16 %v720
    %v1113 = vunpack.c.l.b16 %v721
    %v1114 = vunpack.c.h.b16 %v721
    %v1115 = vunpack.c.l.b16 %v722
    %v1116 = vunpack.c.h.b16 %v722
    %v1117 = vunpack.c.l.b16 %v723
    %v1118 = vunpack.c.h.b16 %v723
    %v1119 = vunpack.c.l.b16 %v724
    %v1120 = vunpack.c.h.b16 %v724
    %v1121 = vunpack.c.l.b16 %v725
    %v1122 = vunpack.c.h.b16 %v725
    %v1123 = vunpack.c.l.b16 %v726
    %v1124 = vunpack.c.h.b16 %v726
    %v1125 = vunpack.c.l.b16 %v727
    %v1126 = vunpack.c.h.b16 %v727
    %v1127 = vunpack.c.l.b16 %v728
    %v1128 = vunpack.c.h.b16 %v728
    %v1129 = vunpack.c.l.b16 %v729
    %v1130 = vunpack.c.h.b16 %v729
    %v1131 = vunpack.c.l.b16 %v730
    %v1132 = vunpack.c.h.b16 %v730
    %v1133 = vunpack.c.l.b16 %v731
    %v1134 = vunpack.c.h.b16 %v731
    %v1135 = vunpack.c.l.b16 %v732
    %v1136 = vunpack.c.h.b16 %v732
    %v1137 = vunpack.c.l.b16 %v733
    %v1138 = vunpack.c.h.b16 %v733
    %v1139 = vunpack.c.l.b16 %v734
    %v1140 = vunpack.c.h.b16 %v734
    %v1141 = vpack.c.b16 %v889, %v885
    %v1142 = vpack.c.b16 %v890, %v886
    %v1143 = vpack.c.b16 %v891, %v887
    %v1144 = vpack.c.b16 %v892, %v888
    %v1145 = vpack.c.b16 %v897, %v893
    %v1146 = vpack.c.b16 %v898, %v894
    %v1147 = vpack.c.b16 %v899, %v895
    %v1148 = vpack.c.b16 %v900, %v896
    %v1149 = vpack.c.b16 %v905, %v901
    %v1150 = vpack.c.b16 %v906, %v902
    %v1151 = vpack.c.b16 %v907, %v903
    %v1152 = vpack.c.b16 %v908, %v904
    %v1153 = vpack.c.b16 %v913, %v909
    %v1154 = vpack.c.b16 %v914, %v910
    %v1155 = vpack.c.b16 %v915, %v911
    %v1156 = vpack.c.b16 %v916, %v912
    %v1157 = vpack.c.b16 %v921, %v917
    %v1158 = vpack.c.b16 %v922, %v918
    %v1159 = vpack.c.b16 %v923, %v919
    %v1160 = vpack.c.b16 %v924, %v920
    %v1161 = vpack.c.b16 %v929, %v925
    %v1162 = vpack.c.b16 %v930, %v926
    %v1163 = vpack.c.b16 %v931, %v927
    %v1164 = vpack.c.b16 %v932, %v928
    %v1165 = vpack.c.b16 %v937, %v933
    %v1166 = vpack.c.b16 %v938, %v934
    %v1167 = vpack.c.b16 %v939, %v935
    %v1168 = vpack.c.b16 %v940, %v936
    %v1169 = vpack.c.b16 %v945, %v941
    %v1170 = vpack.c.b16 %v946, %v942
    %v1171 = vpack.c.b16 %v947, %v943
    %v1172 = vpack.c.b16 %v948, %v944
    %v1173 = vpack.c.b16 %v953, %v949
    %v1174 = vpack.c.b16 %v954, %v950
    %v1175 = vpack.c.b16 %v955, %v951
    %v1176 = vpack.c.b16 %v956, %v952
    %v1177 = vpack.c.b16 %v961, %v957
    %v1178 = vpack.c.b16 %v962, %v958
    %v1179 = vpack.c.b16 %v963, %v959
    %v1180 = vpack.c.b16 %v964, %v960
    %v1181 = vpack.c.b16 %v969, %v965
    %v1182 = vpack.c.b16 %v970, %v966
    %v1183 = vpack.c.b16 %v971, %v967
    %v1184 = vpack.c.b16 %v972, %v968
    %v1185 = vpack.c.b16 %v977, %v973
    %v1186 = vpack.c.b16 %v978, %v974
    %v1187 = vpack.c.b16 %v979, %v975
    %v1188 = vpack.c.b16 %v980, %v976
    %v1189 = vpack.c.b16 %v985, %v981
    %v1190 = vpack.c.b16 %v986, %v982
    %v1191 = vpack.c.b16 %v987, %v983
    %v1192 = vpack.c.b16 %v988, %v984
    %v1193 = vpack.c.b16 %v993, %v989
    %v1194 = vpack.c.b16 %v994, %v990
    %v1195 = vpack.c.b16 %v995, %v991
    %v1196 = vpack.c.b16 %v996, %v992
    %v1197 = vpack.c.b16 %v1001, %v997
    %v1198 = vpack.c.b16 %v1002, %v998
    %v1199 = vpack.c.b16 %v1003, %v999
    %v1200 = vpack.c.b16 %v1004, %v1000
    %v1201 = vpack.c.b16 %v1009, %v1005
    %v1202 = vpack.c.b16 %v1010, %v1006
    %v1203 = vpack.c.b16 %v1011, %v1007
    %v1204 = vpack.c.b16 %v1012, %v1008
    %v1205 = vpack.c.b16 %v1017, %v1013
    %v1206 = vpack.c.b16 %v1018, %v1014
    %v1207 = vpack.c.b16 %v1019, %v1015
    %v1208 = vpack.c.b16 %v1020, %v1016
    %v1209 = vpack.c.b16 %v1025, %v1021
    %v1210 = vpack.c.b16 %v1026, %v1022
    %v1211 = vpack.c.b16 %v1027, %v1023
    %v1212 = vpack.c.b16 %v1028, %v1024
    %v1213 = vpack.c.b16 %v1033, %v1029
    %v1214 = vpack.c.b16 %v1034, %v1030
    %v1215 = vpack.c.b16 %v1035, %v1031
    %v1216 = vpack.c.b16 %v1036, %v1032
    %v1217 = vpack.c.b16 %v1041, %v1037
    %v1218 = vpack.c.b16 %v1042, %v1038
    %v1219 = vpack.c.b16 %v1043, %v1039
    %v1220 = vpack.c.b16 %v1044, %v1040
    %v1221 = vpack.c.b16 %v1049, %v1045
    %v1222 = vpack.c.b16 %v1050, %v1046
    %v1223 = vpack.c.b16 %v1051, %v1047
    %v1224 = vpack.c.b16 %v1052, %v1048
    %v1225 = vpack.c.b16 %v1057, %v1053
    %v1226 = vpack.c.b16 %v1058, %v1054
    %v1227 = vpack.c.b16 %v1059, %v1055
    %v1228 = vpack.c.b16 %v1060, %v1056
    %v1229 = vpack.c.b16 %v1065, %v1061
    %v1230 = vpack.c.b16 %v1066, %v1062
    %v1231 = vpack.c.b16 %v1067, %v1063
    %v1232 = vpack.c.b16 %v1068, %v1064
    %v1233 = vpack.c.b16 %v1073, %v1069
    %v1234 = vpack.c.b16 %v1074, %v1070
    %v1235 = vpack.c.b16 %v1075, %v1071
    %v1236 = vpack.c.b16 %v1076, %v1072
    %v1237 = vpack.c.b16 %v1081, %v1077
    %v1238 = vpack.c.b16 %v1082, %v1078
    %v1239 = vpack.c.b16 %v1083, %v1079
    %v1240 = vpack.c.b16 %v1084, %v1080
    %v1241 = vpack.c.b16 %v1089, %v1085
    %v1242 = vpack.c.b16 %v1090, %v1086
    %v1243 = vpack.c.b16 %v1091, %v1087
    %v1244 = vpack.c.b16 %v1092, %v1088
    %v1245 = vpack.c.b16 %v1097, %v1093
    %v1246 = vpack.c.b16 %v1098, %v1094
    %v1247 = vpack.c.b16 %v1099, %v1095
    %v1248 = vpack.c.b16 %v1100, %v1096
    %v1249 = vpack.c.b16 %v1105, %v1101
    %v1250 = vpack.c.b16 %v1106, %v1102
    %v1251 = vpack.c.b16 %v1107, %v1103
    %v1252 = vpack.c.b16 %v1108, %v1104
    %v1253 = vpack.c.b16 %v1113, %v1109
    %v1254 = vpack.c.b16 %v1114, %v1110
    %v1255 = vpack.c.b16 %v1115, %v1111
    %v1256 = vpack.c.b16 %v1116, %v1112
    %v1257 = vpack.c.b16 %v1121, %v1117
    %v1258 = vpack.c.b16 %v1122, %v1118
    %v1259 = vpack.c.b16 %v1123, %v1119
    %v1260 = vpack.c.b16 %v1124, %v1120
    %v1261 = vpack.c.b16 %v1129, %v1125
    %v1262 = vpack.c.b16 %v1130, %v1126
    %v1263 = vpack.c.b16 %v1131, %v1127
    %v1264 = vpack.c.b16 %v1132, %v1128
    %v1265 = vpack.c.b16 %v1137, %v1133
    %v1266 = vpack.c.b16 %v1138, %v1134
    %v1267 = vpack.c.b16 %v1139, %v1135
    %v1268 = vpack.c.b16 %v1140, %v1136
    %1397 = vmatprep.subr.bf16.mxu0 %v1142
    %1398 = vmatpush1.bf16.msra.mxu0 %v1141
    %1399 = vmatprep.subr.bf16.mxu0 %v1146
    %1400 = vmatpush1.bf16.msra.mxu0 %v1145
    %1401 = vmatprep.subr.bf16.mxu0 %v1150
    %1402 = vmatpush1.bf16.msra.mxu0 %v1149
    %1403 = vmatprep.subr.bf16.mxu0 %v1154
    %1404 = vmatpush1.bf16.msra.mxu0 %v1153
    %1405 = vmatprep.subr.bf16.mxu0 %v1158
    %1406 = vmatpush1.bf16.msra.mxu0 %v1157
    %1407 = vmatprep.subr.bf16.mxu0 %v1162
    %1408 = vmatpush1.bf16.msra.mxu0 %v1161
    %1409 = vmatprep.subr.bf16.mxu0 %v1166
    %1410 = vmatpush1.bf16.msra.mxu0 %v1165
    %1411 = vmatprep.subr.bf16.mxu0 %v1170
    %1412 = vmatpush1.bf16.msra.mxu0 %v1169
    %1413 = vmatprep.subr.bf16.mxu0 %v1174
    %1414 = vmatpush1.bf16.msra.mxu0 %v1173
    %1415 = vmatprep.subr.bf16.mxu0 %v1178
    %1416 = vmatpush1.bf16.msra.mxu0 %v1177
    %1417 = vmatprep.subr.bf16.mxu0 %v1182
    %1418 = vmatpush1.bf16.msra.mxu0 %v1181
    %1419 = vmatprep.subr.bf16.mxu0 %v1186
    %1420 = vmatpush1.bf16.msra.mxu0 %v1185
    %1421 = vmatprep.subr.bf16.mxu0 %v1190
    %1422 = vmatpush1.bf16.msra.mxu0 %v1189
    %1423 = vmatprep.subr.bf16.mxu0 %v1194
    %1424 = vmatpush1.bf16.msra.mxu0 %v1193
    %1425 = vmatprep.subr.bf16.mxu0 %v1198
    %1426 = vmatpush1.bf16.msra.mxu0 %v1197
    %1427 = vmatprep.subr.bf16.mxu0 %v1202
    %1428 = vmatpush1.bf16.msra.mxu0 %v1201
    %1429 = vmatprep.mubr.bf16.mxu0 %v604
    %1430 = vmatmul.mubr.bf16.gmra.mrb[0].mxu0 %v603
    %v1431 = vpop.f32.mrb[0].mxu0
    %v1432 = vadd.f32 %v740, %v1431
    %v1433 = vpop.f32.mrb[0].mxu0
    %v1434 = vadd.f32 %v744, %v1433
    %v1435 = vpop.f32.mrb[0].mxu0
    %v1436 = vpop.f32.mrb[0].mxu0
    %1437 = vdwg.mxu0
    %1438 = vmatprep.subr.bf16.mxu0 %v1206
    %1439 = vmatpush1.bf16.msra.mxu0 %v1205
    %1440 = vmatprep.subr.bf16.mxu0 %v1210
    %1441 = vmatpush1.bf16.msra.mxu0 %v1209
    %1442 = vmatprep.subr.bf16.mxu0 %v1214
    %1443 = vmatpush1.bf16.msra.mxu0 %v1213
    %1444 = vmatprep.subr.bf16.mxu0 %v1218
    %1445 = vmatpush1.bf16.msra.mxu0 %v1217
    %1446 = vmatprep.subr.bf16.mxu0 %v1222
    %1447 = vmatpush1.bf16.msra.mxu0 %v1221
    %1448 = vmatprep.subr.bf16.mxu0 %v1226
    %1449 = vmatpush1.bf16.msra.mxu0 %v1225
    %1450 = vmatprep.subr.bf16.mxu0 %v1230
    %1451 = vmatpush1.bf16.msra.mxu0 %v1229
    %1452 = vmatprep.subr.bf16.mxu0 %v1234
    %1453 = vmatpush1.bf16.msra.mxu0 %v1233
    %1454 = vmatprep.subr.bf16.mxu0 %v1238
    %1455 = vmatpush1.bf16.msra.mxu0 %v1237
    %1456 = vmatprep.subr.bf16.mxu0 %v1242
    %1457 = vmatpush1.bf16.msra.mxu0 %v1241
    %1458 = vmatprep.subr.bf16.mxu0 %v1246
    %1459 = vmatpush1.bf16.msra.mxu0 %v1245
    %1460 = vmatprep.subr.bf16.mxu0 %v1250
    %1461 = vmatpush1.bf16.msra.mxu0 %v1249
    %1462 = vmatprep.subr.bf16.mxu0 %v1254
    %1463 = vmatpush1.bf16.msra.mxu0 %v1253
    %1464 = vmatprep.subr.bf16.mxu0 %v1258
    %1465 = vmatpush1.bf16.msra.mxu0 %v1257
    %1466 = vmatprep.subr.bf16.mxu0 %v1262
    %1467 = vmatpush1.bf16.msra.mxu0 %v1261
    %1468 = vmatprep.subr.bf16.mxu0 %v1266
    %1469 = vmatpush1.bf16.msra.mxu0 %v1265
    %1470 = vmatprep.mubr.bf16.mxu0 %v606
    %1471 = vmatmul.mubr.bf16.gmra.mrb[0].mxu0 %v605
    %v1472 = vpop.f32.mrb[0].mxu0
    %v1473 = vadd.f32 %v1432, %v1472
    %v1474 = vpop.f32.mrb[0].mxu0
    %v1475 = vadd.f32 %v1434, %v1474
    %v1476 = vpop.f32.mrb[0].mxu0
    %v1477 = vpop.f32.mrb[0].mxu0
    %1478 = vdwg.mxu0
    %1479 = vmatprep.subr.bf16.mxu0 %v1144
    %1480 = vmatpush1.bf16.msra.mxu0 %v1143
    %1481 = vmatprep.subr.bf16.mxu0 %v1148
    %1482 = vmatpush1.bf16.msra.mxu0 %v1147
    %1483 = vmatprep.subr.bf16.mxu0 %v1152
    %1484 = vmatpush1.bf16.msra.mxu0 %v1151
    %1485 = vmatprep.subr.bf16.mxu0 %v1156
    %1486 = vmatpush1.bf16.msra.mxu0 %v1155
    %1487 = vmatprep.subr.bf16.mxu0 %v1160
    %1488 = vmatpush1.bf16.msra.mxu0 %v1159
    %1489 = vmatprep.subr.bf16.mxu0 %v1164
    %1490 = vmatpush1.bf16.msra.mxu0 %v1163
    %1491 = vmatprep.subr.bf16.mxu0 %v1168
    %1492 = vmatpush1.bf16.msra.mxu0 %v1167
    %1493 = vmatprep.subr.bf16.mxu0 %v1172
    %1494 = vmatpush1.bf16.msra.mxu0 %v1171
    %1495 = vmatprep.subr.bf16.mxu0 %v1176
    %1496 = vmatpush1.bf16.msra.mxu0 %v1175
    %1497 = vmatprep.subr.bf16.mxu0 %v1180
    %1498 = vmatpush1.bf16.msra.mxu0 %v1179
    %1499 = vmatprep.subr.bf16.mxu0 %v1184
    %1500 = vmatpush1.bf16.msra.mxu0 %v1183
    %1501 = vmatprep.subr.bf16.mxu0 %v1188
    %1502 = vmatpush1.bf16.msra.mxu0 %v1187
    %1503 = vmatprep.subr.bf16.mxu0 %v1192
    %1504 = vmatpush1.bf16.msra.mxu0 %v1191
    %1505 = vmatprep.subr.bf16.mxu0 %v1196
    %1506 = vmatpush1.bf16.msra.mxu0 %v1195
    %1507 = vmatprep.subr.bf16.mxu0 %v1200
    %1508 = vmatpush1.bf16.msra.mxu0 %v1199
    %1509 = vmatprep.subr.bf16.mxu0 %v1204
    %1510 = vmatpush1.bf16.msra.mxu0 %v1203
    %1511 = vmatprep.mubr.bf16.mxu0 %v604
    %1512 = vmatmul.mubr.bf16.gmra.mrb[0].mxu0 %v603
    %v1513 = vpop.f32.mrb[0].mxu0
    %v1514 = vadd.f32 %v748, %v1513
    %v1515 = vpop.f32.mrb[0].mxu0
    %v1516 = vadd.f32 %v752, %v1515
    %v1517 = vpop.f32.mrb[0].mxu0
    %v1518 = vpop.f32.mrb[0].mxu0
    %1519 = vdwg.mxu0
    %1520 = vmatprep.subr.bf16.mxu0 %v1208
    %1521 = vmatpush1.bf16.msra.mxu0 %v1207
    %1522 = vmatprep.subr.bf16.mxu0 %v1212
    %1523 = vmatpush1.bf16.msra.mxu0 %v1211
    %1524 = vmatprep.subr.bf16.mxu0 %v1216
    %1525 = vmatpush1.bf16.msra.mxu0 %v1215
    %1526 = vmatprep.subr.bf16.mxu0 %v1220
    %1527 = vmatpush1.bf16.msra.mxu0 %v1219
    %1528 = vmatprep.subr.bf16.mxu0 %v1224
    %1529 = vmatpush1.bf16.msra.mxu0 %v1223
    %1530 = vmatprep.subr.bf16.mxu0 %v1228
    %1531 = vmatpush1.bf16.msra.mxu0 %v1227
    %1532 = vmatprep.subr.bf16.mxu0 %v1232
    %1533 = vmatpush1.bf16.msra.mxu0 %v1231
    %1534 = vmatprep.subr.bf16.mxu0 %v1236
    %1535 = vmatpush1.bf16.msra.mxu0 %v1235
    %1536 = vmatprep.subr.bf16.mxu0 %v1240
    %1537 = vmatpush1.bf16.msra.mxu0 %v1239
    %1538 = vmatprep.subr.bf16.mxu0 %v1244
    %1539 = vmatpush1.bf16.msra.mxu0 %v1243
    %1540 = vmatprep.subr.bf16.mxu0 %v1248
    %1541 = vmatpush1.bf16.msra.mxu0 %v1247
    %1542 = vmatprep.subr.bf16.mxu0 %v1252
    %1543 = vmatpush1.bf16.msra.mxu0 %v1251
    %1544 = vmatprep.subr.bf16.mxu0 %v1256
    %1545 = vmatpush1.bf16.msra.mxu0 %v1255
    %1546 = vmatprep.subr.bf16.mxu0 %v1260
    %1547 = vmatpush1.bf16.msra.mxu0 %v1259
    %1548 = vmatprep.subr.bf16.mxu0 %v1264
    %1549 = vmatpush1.bf16.msra.mxu0 %v1263
    %1550 = vmatprep.subr.bf16.mxu0 %v1268
    %1551 = vmatpush1.bf16.msra.mxu0 %v1267
    %1552 = vmatprep.mubr.bf16.mxu0 %v606
    %1553 = vmatmul.mubr.bf16.gmra.mrb[0].mxu0 %v605
    %v1554 = vpop.f32.mrb[0].mxu0
    %v1555 = vadd.f32 %v1514, %v1554
    %v1556 = vpop.f32.mrb[0].mxu0
    %v1557 = vadd.f32 %v1516, %v1556
    %v1558 = vpop.f32.mrb[0].mxu0
    %v1559 = vpop.f32.mrb[0].mxu0
    %1560 = vdwg.mxu0
    %1561 = vst [vmem:[#allocation7] sm:$0xff] %v1473
    %1562 = vst [vmem:[#allocation7 + $0x8] sm:$0xff] %v1475
    %1563 = vst [vmem:[#allocation7 + $0x10] sm:$0xff] %v1555
    %1564 = vst [vmem:[#allocation7 + $0x18] sm:$0xff] %v1557
    // Predicated region
    $region34: #{tpu_custom_call.1} parent=1 // pred_check
      _
    $region35: #{tpu_custom_call.1} parent=1 // pred_check_branch
      %1566 = sbr.rel (0) target = $region37
    $region36: #{tpu_custom_call.1} parent=1 // pred_region
      %s1568 = ssub.s32 512, 512
      %1569 = vsyncadd [#allocation4], %s1568
      %s1571 = sshll.u32 [#allocation7], 4
      %s1572 = int_to_ptr.vmem [resolvable:$true] %s1571
      %1574 = dma.vmem_to_hbm [thread:$0]  %s1572, 512, %s6, [#allocation4]
    $region37: #{tpu_custom_call.1} parent=1 // pred_fallthru
      _
    // Predicated region
    $region38: #{tpu_custom_call.1} parent=1 // pred_check
      _
    $region39: #{tpu_custom_call.1} parent=1 // pred_check_branch
      %1576 = sbr.rel (0) target = $region41
    $region40: #{tpu_custom_call.1} parent=1 // pred_region
      %1577 = dma.done [#allocation4], 512
    $region41: #{tpu_custom_call.1} parent=1 // pred_fallthru
      _
    %1578 = vsyncpa [#allocation3], 1
    %1579 = vsyncpa [#allocation6], 1
    %1580 = vsyncpa [#allocation4], 1

</llo_original>
